<compile_context>
chip_gen: v5e
topology: v5e:2x2
jax: 0.10.0
libtpu: 0.0.40
codegen_flags: <defaults>
</compile_context>

<pallas_src>
import functools

import jax
import jax.numpy as jnp
from jax.experimental import pallas as pl
from jax.experimental.pallas import tpu as pltpu

EPS = 1e-5


def _luconv_kernel(w_ref, p_ref, v_ref, o_ref, *, C, N, HW, relu):
    # w_ref : (Cout, 9*Cin)  bf16   conv weight in im2col layout (k = ci*9 + kh*3 + kw)
    # p_ref : (9*Cin, M)     bf16   im2col patches, M = N*H*W (columns n-major, lane-dense)
    # v_ref : (k*C, 1)       f32    packed per-channel params: [gamma; beta; (alpha)]
    # o_ref : (N, C, HW)     f32
    M = N * HW

    # Single MXU matmul, f32 accumulation.  (Conv bias omitted: a per-channel constant
    # is exactly cancelled by the training-mode BN mean subtraction below.)
    # TODO(synk): reinstate bias (and running stats) if eval-mode BN is ever needed.
    y = jnp.dot(w_ref[...], p_ref[...], preferred_element_type=jnp.float32)   # (C, M)

    # BatchNorm2d, training-mode batch stats, single pass over the (C, M) slab.
    inv_m = 1.0 / M
    mean = jnp.sum(y, axis=1, keepdims=True) * inv_m           # (C, 1)
    ex2 = jnp.sum(y * y, axis=1, keepdims=True) * inv_m        # (C, 1)  E[y^2]
    var = ex2 - mean * mean                                    # biased variance

    gamma = v_ref[0:C, :]                                      # 8-aligned sublane slices
    beta = v_ref[C:2 * C, :]
    scale = gamma * jax.lax.rsqrt(var + EPS)                   # EUP rsqrt (free slot)
    shift = beta - mean * scale
    z = y * scale + shift                                      # fused BN affine (f32)

    if relu:
        z = jnp.maximum(z, 0.0)
    else:  # PReLU with per-channel slope
        alpha = v_ref[2 * C:3 * C, :]
        z = jnp.maximum(z, 0.0) + alpha * jnp.minimum(z, 0.0)

    # Per-image slab stores -> output laid out (N, C, H*W): lane-dense (C, 256) stores,
    # and no separate NCHW transpose kernel afterwards.
    for n in range(N):
        o_ref[n] = z[:, n * HW:(n + 1) * HW]


@functools.partial(jax.jit, static_argnames=("relu",))
def luconv_forward(x_nchw, w_oihw, bias, gamma, beta, alpha=None, *, relu=True):
    """LUconv forward: Conv2d(3x3, pad=1) -> BatchNorm2d (batch stats) -> ReLU/PReLU."""
    # Conv bias is accepted for API parity but is a mathematical no-op under
    # training-mode BN (mean subtraction cancels any per-channel constant).
    del bias
    N, C, H, W = x_nchw.shape
    HW = H * W
    M = N * HW

    # bf16 BEFORE the im2col so the materialized (9*Cin, M) patch copy is written/read
    # from HBM at half width.  MXU accumulation stays f32 inside the kernel.
    x = x_nchw.astype(jnp.bfloat16)

    # im2col (fused under jit).  Row k = ci*9 + kh*3 + kw matches w_oihw.reshape(C, C*9);
    # columns are n-major (n, h, w) so the kernel can emit per-image output slabs.
    xp = jnp.pad(x, ((0, 0), (0, 0), (1, 1), (1, 1)))                    # padding=1
    taps = [xp[:, :, kh:kh + H, kw:kw + W]                               # each (N, C, H, W)
            for kh in range(3) for kw in range(3)]
    patches = jnp.stack(taps, axis=2)                                    # (N, C, 9, H, W)
    patches = patches.transpose(1, 2, 0, 3, 4).reshape(C * 9, M)         # (9*Cin, M) bf16

    w_mat = w_oihw.astype(jnp.float32).reshape(C, C * 9).astype(jnp.bfloat16)

    # Per-channel BN / activation params packed into ONE small array -> one DMA,
    # sliced at 8-aligned sublane offsets in the kernel.
    cols = [gamma, beta] if relu else [gamma, beta, alpha]
    vecs = jnp.concatenate([c.astype(jnp.float32).reshape(C, 1) for c in cols], axis=0)

    kernel = functools.partial(_luconv_kernel, C=C, N=N, HW=HW, relu=relu)

    cost = pl.CostEstimate(
        flops=2 * C * (9 * C) * M + 10 * C * M,       # matmul + BN/activation passes
        transcendentals=C,                            # per-channel rsqrt
        bytes_accessed=patches.size * 2 + w_mat.size * 2 + vecs.size * 4 + C * M * 4,
    )

    out_flat = pl.pallas_call(
        kernel,
        out_shape=jax.ShapeDtypeStruct((N, C, HW), jnp.float32),
        grid=(1,),  # tiny problem + BN needs full-batch stats -> single invocation
        in_specs=[
            pl.BlockSpec((C, C * 9), lambda i: (0, 0)),
            pl.BlockSpec((C * 9, M), lambda i: (0, 0)),
            pl.BlockSpec((vecs.shape[0], 1), lambda i: (0, 0)),
        ],
        out_specs=pl.BlockSpec((N, C, HW), lambda i: (0, 0, 0)),
        compiler_params=pltpu.CompilerParams(dimension_semantics=("arbitrary",)),
        cost_estimate=cost,
    )(w_mat, patches, vecs)

    # (N, C, H*W) -> (N, C, H, W): contiguous split of the last axis, free (no transpose).
    return out_flat.reshape(N, C, H, W)


if __name__ == "__main__":
    key = jax.random.PRNGKey(0)
    kx, kw, kb, kg, kbe = jax.random.split(key, 5)

    N, C, H, W = 2, 8, 16, 16   # nchan = 8

    x = jax.random.normal(kx, (N, C, H, W), jnp.float32)
    w = 0.1 * jax.random.normal(kw, (C, C, 3, 3), jnp.float32)    # Conv2d weight (O,I,kh,kw)
    b = 0.1 * jax.random.normal(kb, (C,), jnp.float32)            # Conv2d bias
    gamma = 1.0 + 0.1 * jax.random.normal(kg, (C,), jnp.float32)  # BN weight
    beta = 0.1 * jax.random.normal(kbe, (C,), jnp.float32)        # BN bias

    def reference(alpha_vec):
        # Conv inputs rounded to bf16 to mirror the kernel's MXU operand precision
        # (accumulation stays f32 on both paths).  Bias is INCLUDED here to demonstrate
        # that omitting it in the kernel is exact under training-mode BN.
        xb = x.astype(jnp.bfloat16).astype(jnp.float32)
        wb = w.astype(jnp.bfloat16).astype(jnp.float32)
        conv = jax.lax.conv_general_dilated(
            xb, wb, window_strides=(1, 1), padding="SAME",
            dimension_numbers=("NCHW", "OIHW", "NCHW"),
            precision=jax.lax.Precision.HIGHEST) + b[None, :, None, None]
        mean = conv.mean(axis=(0, 2, 3), keepdims=True)
        var = ((conv - mean) ** 2).mean(axis=(0, 2, 3), keepdims=True)
        r = gamma[None, :, None, None] * (conv - mean) / jnp.sqrt(var + EPS) \
            + beta[None, :, None, None]
        return jnp.maximum(r, 0.0) + alpha_vec[None, :, None, None] * jnp.minimum(r, 0.0)

    # LUconv(nchan, relu=True)  -> Conv -> BN -> nn.ReLU
    out_relu = jax.block_until_ready(luconv_forward(x, w, b, gamma, beta, relu=True))
    ref_relu = reference(jnp.zeros((C,), jnp.float32))
    assert out_relu.shape == (N, C, H, W) and out_relu.dtype == jnp.float32
    err = float(jnp.abs(out_relu - ref_relu).max())
    assert jnp.allclose(out_relu, ref_relu, atol=1e-3, rtol=1e-3), err

    # LUconv(nchan, relu=False) -> Conv -> BN -> nn.PReLU(nchan) (default slope 0.25)
    alpha = jnp.full((C,), 0.25, jnp.float32)
    out_prelu = jax.block_until_ready(
        luconv_forward(x, w, b, gamma, beta, alpha, relu=False))
    ref_prelu = reference(alpha)
    err = float(jnp.abs(out_prelu - ref_prelu).max())
    assert jnp.allclose(out_prelu, ref_prelu, atol=1e-3, rtol=1e-3), err

    print("KERNEL_OK")
</pallas_src>

<mosaic_0001>
module attributes {stable_mosaic.version = 11 : i64} {
  func.func @_luconv_kernel(%arg0: i32, %arg1: memref<8x72xbf16, #tpu.memory_space<vmem>>, %arg2: memref<72x512xbf16, #tpu.memory_space<vmem>>, %arg3: memref<16x1xf32, #tpu.memory_space<vmem>>, %arg4: memref<2x8x256xf32, #tpu.memory_space<vmem>>) attributes {dimension_semantics = [#tpu.dimension_semantics<arbitrary>], iteration_bounds = array<i64: 1>, scalar_prefetch = 0 : i64, scratch_operands = 0 : i64, tpu.core_type = #tpu.core_type<tc>, window_params = [{pipeline_mode = #tpu.pipeline_mode<synchronous>, transform_indices = @transform_0, window_bounds = array<i64: 8, 72>}, {pipeline_mode = #tpu.pipeline_mode<synchronous>, transform_indices = @transform_1, window_bounds = array<i64: 72, 512>}, {pipeline_mode = #tpu.pipeline_mode<synchronous>, transform_indices = @transform_2, window_bounds = array<i64: 16, 1>}, {pipeline_mode = #tpu.pipeline_mode<synchronous>, transform_indices = @transform_3, window_bounds = array<i64: 2, 8, 256>}]} {
    %c0 = arith.constant 0 : index
    %c0_0 = arith.constant 0 : index
    %0 = vector.load %arg1[%c0, %c0_0] : memref<8x72xbf16, #tpu.memory_space<vmem>>, vector<8x72xbf16>
    %c0_1 = arith.constant 0 : index
    %c0_2 = arith.constant 0 : index
    %1 = vector.load %arg2[%c0_1, %c0_2] : memref<72x512xbf16, #tpu.memory_space<vmem>>, vector<72x512xbf16>
    %cst = arith.constant dense<0.000000e+00> : vector<8x512xf32>
    %2 = tpu.matmul %0, %1, %cst {dimension_numbers = #tpu.dot_dimension_numbers<[1], [0], [0], [1], [0, 0, 1, 1], [], []>} : vector<8x72xbf16>, vector<72x512xbf16>, vector<8x512xf32> -> vector<8x512xf32>
    %cst_3 = arith.constant dense<0.000000e+00> : vector<8xf32>
    %3 = vector.multi_reduction <add>, %2, %cst_3 [1] : vector<8x512xf32> to vector<8xf32>
    %4 = vector.shape_cast %3 : vector<8xf32> to vector<8x1xf32>
    %cst_4 = arith.constant 0.001953125 : f32
    %5 = vector.broadcast %cst_4 : f32 to vector<8x1xf32>
    %6 = arith.mulf %4, %5 : vector<8x1xf32>
    %7 = arith.mulf %2, %2 : vector<8x512xf32>
    %cst_5 = arith.constant dense<0.000000e+00> : vector<8xf32>
    %8 = vector.multi_reduction <add>, %7, %cst_5 [1] : vector<8x512xf32> to vector<8xf32>
    %9 = vector.shape_cast %8 : vector<8xf32> to vector<8x1xf32>
    %cst_6 = arith.constant 0.001953125 : f32
    %10 = vector.broadcast %cst_6 : f32 to vector<8x1xf32>
    %11 = arith.mulf %9, %10 : vector<8x1xf32>
    %12 = arith.mulf %6, %6 : vector<8x1xf32>
    %13 = arith.subf %11, %12 : vector<8x1xf32>
    %c0_7 = arith.constant 0 : index
    %c0_8 = arith.constant 0 : index
    %14 = vector.load %arg3[%c0_7, %c0_8] : memref<16x1xf32, #tpu.memory_space<vmem>>, vector<8x1xf32>
    %c8 = arith.constant 8 : index
    %c0_9 = arith.constant 0 : index
    %15 = vector.load %arg3[%c8, %c0_9] : memref<16x1xf32, #tpu.memory_space<vmem>>, vector<8x1xf32>
    %cst_10 = arith.constant 9.99999974E-6 : f32
    %16 = vector.broadcast %cst_10 : f32 to vector<8x1xf32>
    %17 = arith.addf %13, %16 : vector<8x1xf32>
    %18 = math.rsqrt %17 : vector<8x1xf32>
    %19 = arith.mulf %14, %18 : vector<8x1xf32>
    %20 = arith.mulf %6, %19 : vector<8x1xf32>
    %21 = arith.subf %15, %20 : vector<8x1xf32>
    %22 = vector.broadcast %19 : vector<8x1xf32> to vector<8x512xf32>
    %23 = arith.mulf %2, %22 : vector<8x512xf32>
    %24 = vector.broadcast %21 : vector<8x1xf32> to vector<8x512xf32>
    %25 = arith.addf %23, %24 : vector<8x512xf32>
    %cst_11 = arith.constant 0.000000e+00 : f32
    %26 = vector.broadcast %cst_11 : f32 to vector<8x512xf32>
    %27 = arith.maximumf %25, %26 : vector<8x512xf32>
    %28 = vector.extract_strided_slice %27 {offsets = [0, 0], sizes = [8, 256], strides = [1, 1]} : vector<8x512xf32> to vector<8x256xf32>
    %c0_12 = arith.constant 0 : index
    %c0_13 = arith.constant 0 : index
    %c0_14 = arith.constant 0 : index
    %29 = vector.load %arg4[%c0_12, %c0_13, %c0_14] : memref<2x8x256xf32, #tpu.memory_space<vmem>>, vector<1x8x256xf32>
    %30 = vector.shape_cast %29 : vector<1x8x256xf32> to vector<8x256xf32>
    %31 = vector.shape_cast %28 : vector<8x256xf32> to vector<1x8x256xf32>
    tpu.vector_store %arg4[%c0_12, %c0_13, %c0_14], %31 {strides = array<i32>} : memref<2x8x256xf32, #tpu.memory_space<vmem>>, vector<1x8x256xf32>,
    %32 = vector.extract_strided_slice %27 {offsets = [0, 256], sizes = [8, 256], strides = [1, 1]} : vector<8x512xf32> to vector<8x256xf32>
    %c1 = arith.constant 1 : index
    %c0_15 = arith.constant 0 : index
    %c0_16 = arith.constant 0 : index
    %33 = vector.load %arg4[%c1, %c0_15, %c0_16] : memref<2x8x256xf32, #tpu.memory_space<vmem>>, vector<1x8x256xf32>
    %34 = vector.shape_cast %33 : vector<1x8x256xf32> to vector<8x256xf32>
    %35 = vector.shape_cast %32 : vector<8x256xf32> to vector<1x8x256xf32>
    tpu.vector_store %arg4[%c1, %c0_15, %c0_16], %35 {strides = array<i32>} : memref<2x8x256xf32, #tpu.memory_space<vmem>>, vector<1x8x256xf32>,
    return
  }
  func.func @transform_0(%arg0: i32) -> (i32, i32) {
    %c0_i32 = arith.constant 0 : i32
    %c0_i32_0 = arith.constant 0 : i32
    %c0_i32_1 = arith.constant 0 : i32
    return %c0_i32, %c0_i32_0 : i32, i32
  }
  func.func @transform_1(%arg0: i32) -> (i32, i32) {
    %c0_i32 = arith.constant 0 : i32
    %c0_i32_0 = arith.constant 0 : i32
    %c0_i32_1 = arith.constant 0 : i32
    return %c0_i32, %c0_i32_0 : i32, i32
  }
  func.func @transform_2(%arg0: i32) -> (i32, i32) {
    %c0_i32 = arith.constant 0 : i32
    %c0_i32_0 = arith.constant 0 : i32
    %c0_i32_1 = arith.constant 0 : i32
    return %c0_i32, %c0_i32_0 : i32, i32
  }
  func.func @transform_3(%arg0: i32) -> (i32, i32, i32) {
    %c0_i32 = arith.constant 0 : i32
    %c0_i32_0 = arith.constant 0 : i32
    %c0_i32_1 = arith.constant 0 : i32
    %c0_i32_2 = arith.constant 0 : i32
    return %c0_i32, %c0_i32_0, %c0_i32_1 : i32, i32, i32
  }
}

</mosaic_0001>

<llo_original>
// kernel: luconv_forward.1
$region0: #{luconv_forward.1}
  #allocation0 [shape = 'u32[]', space=smem, size = 0x4, offset = 0x4, fixed_abs, tag = 'smem constant byte address 0x4 - core index']
  #allocation1 [shape = 'u32[72,128]{1,0:T(1,128)}', space=vmem, size = 0x9000, scoped, tag = 'internal scratch']
  %s0 = inlined_call_operand.vmem [shape: bf16[8,72], index: 0, kind: input, shape index: {}]
  %s1 = inlined_call_operand.vmem [shape: bf16[72,512], index: 1, kind: input, shape index: {}]
  %s2 = inlined_call_operand.vmem [shape: f32[16,1], index: 2, kind: input, shape index: {}]
  %s3 = inlined_call_operand.vmem [shape: f32[2,8,256], index: 3, kind: output, shape index: {}]
  %s4 = sld [smem:[#allocation0]]
  $region22: #{luconv_forward.1} parent=0
    _
  %s6 = ssub.s32 1, %s4
  %s7 = scalar_select 0, %s6, %s4
  // Predicated region
  $region2: #{luconv_forward.1} parent=0 // pred_check
    _
  $region3: #{luconv_forward.1} parent=0 // pred_check_branch
    %9 = sbr.rel (0) target = $region5
  $region4: #{luconv_forward.1} parent=0 // pred_region
    _
  $region5: #{luconv_forward.1} parent=0 // pred_fallthru
    _
  // Predicated region
  $region6: #{luconv_forward.1} parent=0 // pred_check
    _
  $region7: #{luconv_forward.1} parent=0 // pred_check_branch
    %11 = sbr.rel (0) target = $region9
  $region8: #{luconv_forward.1} parent=0 // pred_region
    _
  $region9: #{luconv_forward.1} parent=0 // pred_fallthru
    _
  // Predicated region
  $region10: #{luconv_forward.1} parent=0 // pred_check
    _
  $region11: #{luconv_forward.1} parent=0 // pred_check_branch
    %13 = sbr.rel (0) target = $region13
  $region12: #{luconv_forward.1} parent=0 // pred_region
    _
  $region13: #{luconv_forward.1} parent=0 // pred_fallthru
    _
  %v15 = vld [vmem:[%s0] sm:$0xf]
  %v16 = vld [vmem:[%s1] sm:$0xff]
  %v17 = vld [vmem:[%s1 + $0x8] sm:$0xff]
  %v18 = vld [vmem:[%s1 + $0x10] sm:$0xff]
  %v19 = vld [vmem:[%s1 + $0x18] sm:$0xff]
  %v20 = vld [vmem:[%s1 + $0x20] sm:$0xff]
  %v21 = vld [vmem:[%s1 + $0x28] sm:$0xff]
  %v22 = vld [vmem:[%s1 + $0x30] sm:$0xff]
  %v23 = vld [vmem:[%s1 + $0x38] sm:$0xff]
  %v24 = vld [vmem:[%s1 + $0x40] sm:$0xff]
  %v25 = vld [vmem:[%s1 + $0x48] sm:$0xff]
  %v26 = vld [vmem:[%s1 + $0x50] sm:$0xff]
  %v27 = vld [vmem:[%s1 + $0x58] sm:$0xff]
  %v28 = vld [vmem:[%s1 + $0x60] sm:$0xff]
  %v29 = vld [vmem:[%s1 + $0x68] sm:$0xff]
  %v30 = vld [vmem:[%s1 + $0x70] sm:$0xff]
  %v31 = vld [vmem:[%s1 + $0x78] sm:$0xff]
  %v32 = vld [vmem:[%s1 + $0x80] sm:$0xff]
  %v33 = vld [vmem:[%s1 + $0x88] sm:$0xff]
  %v52 = vunpack.c.l.b16 %v16
  %v53 = vunpack.c.h.b16 %v16
  %v54 = vunpack.c.l.b16 %v17
  %v55 = vunpack.c.h.b16 %v17
  %v56 = vunpack.c.l.b16 %v18
  %v57 = vunpack.c.h.b16 %v18
  %v58 = vunpack.c.l.b16 %v19
  %v59 = vunpack.c.h.b16 %v19
  %v60 = vunpack.c.l.b16 %v20
  %v61 = vunpack.c.h.b16 %v20
  %v62 = vunpack.c.l.b16 %v21
  %v63 = vunpack.c.h.b16 %v21
  %v64 = vunpack.c.l.b16 %v22
  %v65 = vunpack.c.h.b16 %v22
  %v66 = vunpack.c.l.b16 %v23
  %v67 = vunpack.c.h.b16 %v23
  %v68 = vunpack.c.l.b16 %v24
  %v69 = vunpack.c.h.b16 %v24
  %v70 = vunpack.c.l.b16 %v25
  %v71 = vunpack.c.h.b16 %v25
  %v72 = vunpack.c.l.b16 %v26
  %v73 = vunpack.c.h.b16 %v26
  %v74 = vunpack.c.l.b16 %v27
  %v75 = vunpack.c.h.b16 %v27
  %v76 = vunpack.c.l.b16 %v28
  %v77 = vunpack.c.h.b16 %v28
  %v78 = vunpack.c.l.b16 %v29
  %v79 = vunpack.c.h.b16 %v29
  %v80 = vunpack.c.l.b16 %v30
  %v81 = vunpack.c.h.b16 %v30
  %v82 = vunpack.c.l.b16 %v31
  %v83 = vunpack.c.h.b16 %v31
  %v84 = vunpack.c.l.b16 %v32
  %v85 = vunpack.c.h.b16 %v32
  %v86 = vunpack.c.l.b16 %v33
  %v87 = vunpack.c.h.b16 %v33
  %v88 = vpack.c.b16 %v56, %v52
  %v89 = vpack.c.b16 %v57, %v53
  %v90 = vpack.c.b16 %v58, %v54
  %v91 = vpack.c.b16 %v59, %v55
  %v92 = vpack.c.b16 %v64, %v60
  %v93 = vpack.c.b16 %v65, %v61
  %v94 = vpack.c.b16 %v66, %v62
  %v95 = vpack.c.b16 %v67, %v63
  %v96 = vpack.c.b16 %v72, %v68
  %v97 = vpack.c.b16 %v73, %v69
  %v98 = vpack.c.b16 %v74, %v70
  %v99 = vpack.c.b16 %v75, %v71
  %v100 = vpack.c.b16 %v80, %v76
  %v101 = vpack.c.b16 %v81, %v77
  %v102 = vpack.c.b16 %v82, %v78
  %v103 = vpack.c.b16 %v83, %v79
  %v104 = vpack.c.b16 %v84, %v84
  %v105 = vpack.c.b16 %v85, %v85
  %v106 = vpack.c.b16 %v86, %v86
  %v107 = vpack.c.b16 %v87, %v87
  %vm124 = vcmask 588800
  %v126 = vsel %vm124, %v15, 0
  %vm128 = vcmask 1043456
  %v130 = vsel %vm128, %v104, 0
  %v133 = vsel %vm128, %v105, 0
  %v136 = vsel %vm128, %v106, 0
  %v139 = vsel %vm128, %v107, 0
  %141 = vmatpush.bf16.msra.mxu0 0
  %142 = vmatpush.bf16.msra.mxu0 0
  %143 = vmatpush.bf16.msra.mxu0 0
  %144 = vmatpush.bf16.msra.mxu0 %v130
  %145 = vmatpush.bf16.msra.mxu0 %v100
  %146 = vmatpush.bf16.msra.mxu0 %v96
  %147 = vmatpush.bf16.msra.mxu0 %v92
  %148 = vmatpush.bf16.msra.mxu0 %v88
  %149 = vmatmul.bf16.gmra.mxu0 %v126
  %v150 = vpop.f32.mrf.mxu0
  %v151 = vadd.f32 0.0, %v150
  %v152 = vpop.f32.mrf.mxu0
  %153 = vdwg.mxu0
  %154 = vmatpush.bf16.msra.mxu0 0
  %155 = vmatpush.bf16.msra.mxu0 0
  %156 = vmatpush.bf16.msra.mxu0 0
  %157 = vmatpush.bf16.msra.mxu0 %v133
  %158 = vmatpush.bf16.msra.mxu0 %v101
  %159 = vmatpush.bf16.msra.mxu0 %v97
  %160 = vmatpush.bf16.msra.mxu0 %v93
  %161 = vmatpush.bf16.msra.mxu0 %v89
  %162 = vmatmul.bf16.gmra.mxu0 %v126
  %v163 = vpop.f32.mrf.mxu0
  %v164 = vadd.f32 0.0, %v163
  %v165 = vpop.f32.mrf.mxu0
  %166 = vdwg.mxu0
  %167 = vmatpush.bf16.msra.mxu0 0
  %168 = vmatpush.bf16.msra.mxu0 0
  %169 = vmatpush.bf16.msra.mxu0 0
  %170 = vmatpush.bf16.msra.mxu0 %v136
  %171 = vmatpush.bf16.msra.mxu0 %v102
  %172 = vmatpush.bf16.msra.mxu0 %v98
  %173 = vmatpush.bf16.msra.mxu0 %v94
  %174 = vmatpush.bf16.msra.mxu0 %v90
  %175 = vmatmul.bf16.gmra.mxu0 %v126
  %v176 = vpop.f32.mrf.mxu0
  %v177 = vadd.f32 0.0, %v176
  %v178 = vpop.f32.mrf.mxu0
  %179 = vdwg.mxu0
  %180 = vmatpush.bf16.msra.mxu0 0
  %181 = vmatpush.bf16.msra.mxu0 0
  %182 = vmatpush.bf16.msra.mxu0 0
  %183 = vmatpush.bf16.msra.mxu0 %v139
  %184 = vmatpush.bf16.msra.mxu0 %v103
  %185 = vmatpush.bf16.msra.mxu0 %v99
  %186 = vmatpush.bf16.msra.mxu0 %v95
  %187 = vmatpush.bf16.msra.mxu0 %v91
  %188 = vmatmul.bf16.gmra.mxu0 %v126
  %v189 = vpop.f32.mrf.mxu0
  %v190 = vadd.f32 0.0, %v189
  %v191 = vpop.f32.mrf.mxu0
  %192 = vdwg.mxu0
  %v193 = vadd.f32 %v151, %v164
  %v194 = vadd.f32 %v193, %v177
  %v195 = vadd.f32 %v194, %v190
  %196 = vadd.xlane.f32.xlu0 %v195
  %v197 = vpop.xlane.xlu0 %196
  %v198 = vmul.f32 %v197, 0.001953125
  %v199 = vmul.f32 %v151, %v151
  %v200 = vmul.f32 %v164, %v164
  %v201 = vmul.f32 %v177, %v177
  %v202 = vmul.f32 %v190, %v190
  %v203 = vadd.f32 %v199, %v200
  %v204 = vadd.f32 %v203, %v201
  %v205 = vadd.f32 %v204, %v202
  %206 = vadd.xlane.f32.xlu0 %v205
  %v207 = vpop.xlane.xlu0 %206
  %v208 = vmul.f32 %v207, 0.001953125
  %v209 = vmul.f32 %v198, %v198
  %v210 = vsub.f32 %v208, %v209
  %v211 = vld [vmem:[%s2] sm:$0xff]
  %v212 = vld [vmem:[%s2 + $0x8] sm:$0xff]
  %v213 = vadd.f32 %v210, 1e-05
  %v214 = vrsqrt.pop %v213
  %v215 = vmul.f32 %v214, %v213
  %v216 = vmul.f32 %v215, %v214
  %v217 = vmul.f32 0.5, %v216
  %v218 = vsub.f32 1.5, %v217
  %v219 = vmul.f32 %v214, %v218
  %vm220 = vweird.f32 %v213
  %vm221 = vweird.f32 %v214
  %vm222 = vmor %vm220, %vm221
  %v223 = vsel %vm222, %v214, %v219
  %v224 = vmul.f32 %v211, %v223
  %v225 = vmul.f32 %v198, %v224
  %v226 = vsub.f32 %v212, %v225
  %228 = vset.pattern.permute.xlu0 0
  %229 = vperm.xlu0 %228, %v224
  %v230 = vpop.permute.xlu0 %229
  %v232 = vmul.f32 %v151, %v230
  %v233 = vmul.f32 %v164, %v230
  %v234 = vmul.f32 %v177, %v230
  %v235 = vmul.f32 %v190, %v230
  %237 = vset.pattern.permute.xlu0 0
  %238 = vperm.xlu0 %237, %v226
  %v239 = vpop.permute.xlu0 %238
  %v241 = vadd.f32 %v232, %v239
  %v242 = vadd.f32 %v233, %v239
  %v243 = vadd.f32 %v234, %v239
  %v244 = vadd.f32 %v235, %v239
  %v245 = vmax.f32 %v241, 0.0
  %v246 = vmax.f32 %v242, 0.0
  %v247 = vmax.f32 %v243, 0.0
  %v248 = vmax.f32 %v244, 0.0
  %249 = vst [vmem:[%s3] sm:$0xff] %v245
  %250 = vst [vmem:[%s3 + $0x8] sm:$0xff] %v246
  %s251 = scalar_lea.vmem %s3, 16
  %252 = vst [vmem:[%s251] sm:$0xff] %v247
  %253 = vst [vmem:[%s251 + $0x8] sm:$0xff] %v248
  // Predicated region
  $region14: #{luconv_forward.1} parent=0 // pred_check
    _
  $region15: #{luconv_forward.1} parent=0 // pred_check_branch
    %255 = sbr.rel (0) target = $region17
  $region16: #{luconv_forward.1} parent=0 // pred_region
    _
  $region17: #{luconv_forward.1} parent=0 // pred_fallthru
    _
  // Predicated region
  $region18: #{luconv_forward.1} parent=0 // pred_check
    _
  $region19: #{luconv_forward.1} parent=0 // pred_check_branch
    %257 = sbr.rel (0) target = $region21
  $region20: #{luconv_forward.1} parent=0 // pred_region
    _
  $region21: #{luconv_forward.1} parent=0 // pred_fallthru
    _

</llo_original>
